<compile_context>
chip_gen: v6e
topology: v6e:2x2x1
jax: 0.10.0
libtpu: 0.0.40
codegen_flags: <defaults>
</compile_context>

<pallas_src>
import math

import jax
import jax.numpy as jnp
from jax.experimental import pallas as pl
from jax.experimental.pallas import tpu as pltpu


def _round_up(x, m):
    return (x + m - 1) // m * m


def _pick_tile(size, align, cap):
    """Smallest-waste tile (multiple of `align`, <= cap when splitting)."""
    aligned = _round_up(size, align)
    if aligned <= cap:
        return aligned
    n_tiles = -(-aligned // cap)
    return _round_up(-(-aligned // n_tiles), align)


def _vmem_budget_and_limit():
    """(tile budget, vmem_limit_bytes) derived from the chip's VMEM capacity."""
    cap = 64 * 1024 * 1024  # conservative fallback: v7x per-TensorCore VMEM
    try:
        info = pltpu.get_tpu_info()
        cap = int(getattr(info, "vmem_capacity_bytes", cap)) or cap
    except Exception:
        pass
    return int(0.55 * cap), int(0.75 * cap)


def _arcface_kernel(x_ref, w_ref, winv_ref, o_ref):
    # x_ref:    [TM, TK] bf16  (pre-normalized batch rows)
    # w_ref:    [TN, TK] bf16  (raw weight rows; contraction on last dim)
    # winv_ref: [1, TN]  f32   (per-class inverse L2 norms)
    # o_ref:    [TM, TN]       (cosine logits tile, lane-dense store)
    cosine = jax.lax.dot_general(
        x_ref[...],
        w_ref[...],
        dimension_numbers=(((1,), (1,)), ((), ())),
        preferred_element_type=jnp.float32,
    )
    o_ref[...] = (cosine * winv_ref[...]).astype(o_ref.dtype)


def _arcface_kernel_ktiled(x_ref, w_ref, winv_ref, o_ref, acc_ref):
    # Same as above but with a K reduction axis (grid axis 2, "arbitrary").
    k = pl.program_id(2)

    @pl.when(k == 0)
    def _():
        acc_ref[...] = jnp.zeros_like(acc_ref)

    acc_ref[...] += jax.lax.dot_general(
        x_ref[...],
        w_ref[...],
        dimension_numbers=(((1,), (1,)), ((), ())),
        preferred_element_type=jnp.float32,
    )

    @pl.when(k == pl.num_programs(2) - 1)
    def _():
        o_ref[...] = (acc_ref[...] * winv_ref[...]).astype(o_ref.dtype)


def arcface_forward(x, weights, *, compute_dtype=jnp.bfloat16, out_dtype=jnp.float32):
    """x: [B, D], weights: [C, D] -> cosine logits [B, C] (out_dtype)."""
    B, D = x.shape
    C, Dw = weights.shape
    assert D == Dw, "feature dims must match"

    # ---- wrapper-side prep (cheap, no full weight copy) ----------------------
    # F.normalize(x): x * rsqrt(max(sum(x*x), eps^2)) == x / max(||x||, eps).
    x_f32 = x.astype(jnp.float32)
    x_inv = jax.lax.rsqrt(
        jnp.maximum(jnp.sum(x_f32 * x_f32, axis=1, keepdims=True), jnp.float32(1e-24))
    )
    x_n = (x_f32 * x_inv).astype(compute_dtype)

    # Per-class inverse norms (tiny [C] vector) -- applied as a column scale
    # in-kernel instead of materializing a normalized/transposed weight copy.
    w_f32 = weights.astype(jnp.float32)
    w_inv = jax.lax.rsqrt(
        jnp.maximum(jnp.sum(w_f32 * w_f32, axis=1), jnp.float32(1e-24))
    )
    w_c = weights.astype(compute_dtype)  # raw [C, D] weights for the MXU

    # ---- tile selection (VMEM-budget aware, padding-waste minimizing) --------
    budget, vmem_limit = _vmem_budget_and_limit()
    in_bytes = jnp.dtype(compute_dtype).itemsize
    out_bytes = jnp.dtype(out_dtype).itemsize

    tk = _pick_tile(D, 128, 2048)              # K tile (full D up to 2048)
    k_pad = _round_up(_round_up(D, 128), tk)
    n_k = k_pad // tk
    tm_full = _round_up(B, 8)

    def fits(tm, tn):
        fp = 2 * tm * tk * in_bytes            # x tiles, double-buffered
        fp += 2 * tn * tk * in_bytes           # weight tiles, double-buffered
        fp += 2 * tn * 4                       # w_inv row
        fp += 2 * tm * tn * out_bytes          # output tiles, double-buffered
        if n_k > 1:
            fp += tm * tn * 4                  # f32 accumulator scratch
        return fp <= budget

    chosen = None
    for tm_cap in (tm_full, 2048, 1024, 512, 256, 128, 64, 32, 16, 8):
        if tm_cap > tm_full:
            continue
        tm = _pick_tile(B, 8, tm_cap)
        for tn_cap in (2048, 1024, 512, 256, 128):
            tn = _pick_tile(C, 128, tn_cap)
            if fits(tm, tn):
                chosen = (tm, tn)
                break
        if chosen is not None:
            break
    if chosen is None:
        tm, tn = 8, 128  # extreme fallback; always fits any sane budget
    else:
        tm, tn = chosen

    b_pad = _round_up(B, tm)
    c_pad = _round_up(C, tn)

    # ---- pad (no-ops when shapes are already aligned) -------------------------
    x_p = jnp.pad(x_n, ((0, b_pad - B), (0, k_pad - D)))
    w_p = jnp.pad(w_c, ((0, c_pad - C), (0, k_pad - D)))
    winv_p = jnp.pad(w_inv, (0, c_pad - C)).reshape(1, c_pad)

    # ---- pallas_call ----------------------------------------------------------
    # NOTE: if xprof shows exposed weight DMA at step boundaries, sweeping
    # pipeline_mode=pl.Buffered(3) on the weight BlockSpec is the next knob
    # (check VMEM headroom on v7x first).
    if n_k == 1:
        grid = (b_pad // tm, c_pad // tn)
        in_specs = [
            pl.BlockSpec((tm, tk), lambda i, j: (i, 0)),
            pl.BlockSpec((tn, tk), lambda i, j: (j, 0)),
            pl.BlockSpec((1, tn), lambda i, j: (0, j)),
        ]
        out_spec = pl.BlockSpec((tm, tn), lambda i, j: (i, j))
        kernel = _arcface_kernel
        scratch = []
        dims = ("parallel", "parallel")
    else:
        grid = (b_pad // tm, c_pad // tn, n_k)
        in_specs = [
            pl.BlockSpec((tm, tk), lambda i, j, k: (i, k)),
            pl.BlockSpec((tn, tk), lambda i, j, k: (j, k)),
            pl.BlockSpec((1, tn), lambda i, j, k: (0, j)),
        ]
        out_spec = pl.BlockSpec((tm, tn), lambda i, j, k: (i, j))
        kernel = _arcface_kernel_ktiled
        scratch = [pltpu.VMEM((tm, tn), jnp.float32)]
        dims = ("parallel", "parallel", "arbitrary")

    out = pl.pallas_call(
        kernel,
        out_shape=jax.ShapeDtypeStruct((b_pad, c_pad), out_dtype),
        grid_spec=pltpu.PrefetchScalarGridSpec(
            num_scalar_prefetch=0,
            grid=grid,
            in_specs=in_specs,
            out_specs=out_spec,
            scratch_shapes=scratch,
        ),
        compiler_params=pltpu.CompilerParams(
            dimension_semantics=dims,
            vmem_limit_bytes=vmem_limit,
        ),
    )(x_p, w_p, winv_p)

    # Strip padding (padded rows/cols are exact zeros by construction).
    return out[:B, :C]


if __name__ == "__main__":
    # Small shapes consistent with the module: batch=8, in_features=32, class_num=16.
    B, in_features, class_num = 8, 32, 16

    key = jax.random.PRNGKey(0)
    kx, kw = jax.random.split(key)

    # Deterministic parameter init matching weight_init():
    # uniform(-std, std), std = sqrt(6 / in_features)
    std = math.sqrt(6.0 / in_features)
    weights = jax.random.uniform(
        kw, (class_num, in_features), dtype=jnp.float32, minval=-std, maxval=std
    )
    x = jax.random.normal(kx, (B, in_features), dtype=jnp.float32)

    arcface = jax.jit(arcface_forward)
    cosine = arcface(x, weights)
    jax.block_until_ready(cosine)

    # Reference check (plain JAX, f32) for sanity.
    def ref(x, w):
        xn = x / jnp.maximum(jnp.linalg.norm(x, axis=1, keepdims=True), 1e-12)
        wn = w / jnp.maximum(jnp.linalg.norm(w, axis=1, keepdims=True), 1e-12)
        return xn @ wn.T

    expected = ref(x, weights)
    assert cosine.shape == (B, class_num)
    # bf16 MXU operands with f32 accumulation: cosine in [-1, 1], error ~1e-3.
    assert jnp.allclose(cosine, expected, atol=2e-2), "mismatch vs reference"

    print("KERNEL_OK")
</pallas_src>

<mosaic_0001>
module attributes {stable_mosaic.version = 11 : i64} {
  func.func @_arcface_kernel(%arg0: i32, %arg1: i32, %arg2: memref<8x128xbf16, #tpu.memory_space<vmem>>, %arg3: memref<128x128xbf16, #tpu.memory_space<vmem>>, %arg4: memref<1x128xf32, #tpu.memory_space<vmem>>, %arg5: memref<8x128xf32, #tpu.memory_space<vmem>>) attributes {dimension_semantics = [#tpu.dimension_semantics<parallel>, #tpu.dimension_semantics<parallel>], iteration_bounds = array<i64: 1, 1>, scalar_prefetch = 0 : i64, scratch_operands = 0 : i64, tpu.core_type = #tpu.core_type<tc>, window_params = [{transform_indices = @transform_0, window_bounds = array<i64: 8, 128>}, {transform_indices = @transform_1, window_bounds = array<i64: 128, 128>}, {transform_indices = @transform_2, window_bounds = array<i64: 1, 128>}, {transform_indices = @transform_3, window_bounds = array<i64: 8, 128>}]} {
    %c0 = arith.constant 0 : index
    %c0_0 = arith.constant 0 : index
    %0 = vector.load %arg2[%c0, %c0_0] : memref<8x128xbf16, #tpu.memory_space<vmem>>, vector<8x128xbf16>
    %c0_1 = arith.constant 0 : index
    %c0_2 = arith.constant 0 : index
    %1 = vector.load %arg3[%c0_1, %c0_2] : memref<128x128xbf16, #tpu.memory_space<vmem>>, vector<128x128xbf16>
    %cst = arith.constant dense<0.000000e+00> : vector<8x128xf32>
    %2 = tpu.matmul %0, %1, %cst {dimension_numbers = #tpu.dot_dimension_numbers<[1], [1], [0], [0], [0, 0, 1, 0], [], []>} : vector<8x128xbf16>, vector<128x128xbf16>, vector<8x128xf32> -> vector<8x128xf32>
    %c0_3 = arith.constant 0 : index
    %c0_4 = arith.constant 0 : index
    %3 = vector.load %arg4[%c0_3, %c0_4] : memref<1x128xf32, #tpu.memory_space<vmem>>, vector<1x128xf32>
    %4 = vector.broadcast %3 : vector<1x128xf32> to vector<8x128xf32>
    %5 = arith.mulf %2, %4 : vector<8x128xf32>
    %c0_5 = arith.constant 0 : index
    %c0_6 = arith.constant 0 : index
    %6 = vector.load %arg5[%c0_5, %c0_6] : memref<8x128xf32, #tpu.memory_space<vmem>>, vector<8x128xf32>
    tpu.vector_store %arg5[%c0_5, %c0_6], %5 {strides = array<i32>} : memref<8x128xf32, #tpu.memory_space<vmem>>, vector<8x128xf32>,
    return
  }
  func.func @transform_0(%arg0: i32, %arg1: i32) -> (i32, i32) {
    %c0_i32 = arith.constant 0 : i32
    %c0_i32_0 = arith.constant 0 : i32
    return %arg0, %c0_i32 : i32, i32
  }
  func.func @transform_1(%arg0: i32, %arg1: i32) -> (i32, i32) {
    %c0_i32 = arith.constant 0 : i32
    %c0_i32_0 = arith.constant 0 : i32
    return %arg1, %c0_i32 : i32, i32
  }
  func.func @transform_2(%arg0: i32, %arg1: i32) -> (i32, i32) {
    %c0_i32 = arith.constant 0 : i32
    %c0_i32_0 = arith.constant 0 : i32
    return %c0_i32, %arg1 : i32, i32
  }
  func.func @transform_3(%arg0: i32, %arg1: i32) -> (i32, i32) {
    %c0_i32 = arith.constant 0 : i32
    return %arg0, %arg1 : i32, i32
  }
}

</mosaic_0001>

<llo_original>
// kernel: arcface_forward.1
$region0: #{arcface_forward.1}
  #allocation0 [shape = 'u32[]', space=smem, size = 0x4, offset = 0x4, fixed_abs, tag = 'smem constant byte address 0x4 - core index']
  #allocation1 [shape = 'u32[144,128]{1,0:T(1,128)}', space=vmem, size = 0x12000, scoped, tag = 'internal scratch']
  %s0 = inlined_call_operand.vmem [shape: bf16[8,128], index: 0, kind: input, shape index: {}]
  %s1 = inlined_call_operand.vmem [shape: bf16[128,128], index: 1, kind: input, shape index: {}]
  %s2 = inlined_call_operand.vmem [shape: f32[1,128], index: 2, kind: input, shape index: {}]
  %s3 = inlined_call_operand.hbm [shape: f32[8,128], index: 3, kind: output, shape index: {}]
  %s4 = sld [smem:[#allocation0]]
  $region22: #{arcface_forward.1} parent=0
    _
  %s6 = ssub.s32 1, %s4
  %s7 = scalar_select 0, %s6, %s4
  $region1: #{arcface_forward.1} parent=0
    #allocation2 [shape = 'u8[4096]{0}', space=vmem, size = 0x1000, scoped, tag = 'output window, operand 0, single buffered']
    #allocation3 [shape = 's32[1]{0}', space=sflag, size = 0x4, scoped, tag = 'scoped memory for arcface_forward.1']
    %8 = vsyncpa [#allocation3], 0
    // Predicated region
    $region2: #{arcface_forward.1} parent=1 // pred_check
      _
    $region3: #{arcface_forward.1} parent=1 // pred_check_branch
      %10 = sbr.rel (0) target = $region5
    $region4: #{arcface_forward.1} parent=1 // pred_region
      _
    $region5: #{arcface_forward.1} parent=1 // pred_fallthru
      _
    // Predicated region
    $region6: #{arcface_forward.1} parent=1 // pred_check
      _
    $region7: #{arcface_forward.1} parent=1 // pred_check_branch
      %12 = sbr.rel (0) target = $region9
    $region8: #{arcface_forward.1} parent=1 // pred_region
      _
    $region9: #{arcface_forward.1} parent=1 // pred_fallthru
      _
    // Predicated region
    $region10: #{arcface_forward.1} parent=1 // pred_check
      _
    $region11: #{arcface_forward.1} parent=1 // pred_check_branch
      %14 = sbr.rel (0) target = $region13
    $region12: #{arcface_forward.1} parent=1 // pred_region
      _
    $region13: #{arcface_forward.1} parent=1 // pred_fallthru
      _
    %v16 = vld [vmem:[%s0] sm:$0xf]
    %v17 = vld [vmem:[%s1] sm:$0xf]
    %v18 = vld [vmem:[%s1 + $0x4] sm:$0xf]
    %v19 = vld [vmem:[%s1 + $0x8] sm:$0xf]
    %v20 = vld [vmem:[%s1 + $0xc] sm:$0xf]
    %v21 = vld [vmem:[%s1 + $0x10] sm:$0xf]
    %v22 = vld [vmem:[%s1 + $0x14] sm:$0xf]
    %v23 = vld [vmem:[%s1 + $0x18] sm:$0xf]
    %v24 = vld [vmem:[%s1 + $0x1c] sm:$0xf]
    %v25 = vld [vmem:[%s1 + $0x20] sm:$0xf]
    %v26 = vld [vmem:[%s1 + $0x24] sm:$0xf]
    %v27 = vld [vmem:[%s1 + $0x28] sm:$0xf]
    %v28 = vld [vmem:[%s1 + $0x2c] sm:$0xf]
    %v29 = vld [vmem:[%s1 + $0x30] sm:$0xf]
    %v30 = vld [vmem:[%s1 + $0x34] sm:$0xf]
    %v31 = vld [vmem:[%s1 + $0x38] sm:$0xf]
    %v32 = vld [vmem:[%s1 + $0x3c] sm:$0xf]
    %v49 = vunpack.c.l.b16 %v17
    %v50 = vunpack.c.l.b16 %v18
    %v51 = vunpack.c.l.b16 %v19
    %v52 = vunpack.c.l.b16 %v20
    %v53 = vunpack.c.l.b16 %v21
    %v54 = vunpack.c.l.b16 %v22
    %v55 = vunpack.c.l.b16 %v23
    %v56 = vunpack.c.l.b16 %v24
    %v57 = vunpack.c.l.b16 %v25
    %v58 = vunpack.c.l.b16 %v26
    %v59 = vunpack.c.l.b16 %v27
    %v60 = vunpack.c.l.b16 %v28
    %v61 = vunpack.c.l.b16 %v29
    %v62 = vunpack.c.l.b16 %v30
    %v63 = vunpack.c.l.b16 %v31
    %v64 = vunpack.c.l.b16 %v32
    %v65 = vpack.c.b16 %v50, %v49
    %v66 = vpack.c.b16 %v52, %v51
    %v67 = vpack.c.b16 %v54, %v53
    %v68 = vpack.c.b16 %v56, %v55
    %v69 = vpack.c.b16 %v58, %v57
    %v70 = vpack.c.b16 %v60, %v59
    %v71 = vpack.c.b16 %v62, %v61
    %v72 = vpack.c.b16 %v64, %v63
    %81 = vmatprep.subr.bf16.mxu0 0
    %82 = vmatpush1.bf16.xpose.msra.mxu0 %v72
    %83 = vmatprep.subr.bf16.mxu0 0
    %84 = vmatpush1.bf16.xpose.msra.mxu0 %v71
    %85 = vmatprep.subr.bf16.mxu0 0
    %86 = vmatpush1.bf16.xpose.msra.mxu0 %v70
    %87 = vmatprep.subr.bf16.mxu0 0
    %88 = vmatpush1.bf16.xpose.msra.mxu0 %v69
    %89 = vmatprep.subr.bf16.mxu0 0
    %90 = vmatpush1.bf16.xpose.msra.mxu0 %v68
    %91 = vmatprep.subr.bf16.mxu0 0
    %92 = vmatpush1.bf16.xpose.msra.mxu0 %v67
    %93 = vmatprep.subr.bf16.mxu0 0
    %94 = vmatpush1.bf16.xpose.msra.mxu0 %v66
    %95 = vmatprep.subr.bf16.mxu0 0
    %96 = vmatpush1.bf16.xpose.msra.mxu0 %v65
    %97 = vmatprep.subr.bf16.mxu0 0
    %98 = vmatpush2.bf16.xpose.msra.mxu0 0
    %99 = vmatprep.subr.bf16.mxu0 0
    %100 = vmatpush2.bf16.xpose.msra.mxu0 0
    %101 = vmatprep.subr.bf16.mxu0 0
    %102 = vmatpush2.bf16.xpose.msra.mxu0 0
    %103 = vmatprep.subr.bf16.mxu0 0
    %104 = vmatpush2.bf16.xpose.msra.mxu0 0
    %105 = vmatprep.subr.bf16.mxu0 0
    %106 = vmatpush2.bf16.xpose.msra.mxu0 0
    %107 = vmatprep.subr.bf16.mxu0 0
    %108 = vmatpush2.bf16.xpose.msra.mxu0 0
    %109 = vmatprep.subr.bf16.mxu0 0
    %110 = vmatpush2.bf16.xpose.msra.mxu0 0
    %111 = vmatprep.subr.bf16.mxu0 0
    %112 = vmatpush2.bf16.xpose.msra.mxu0 0
    %113 = vmatprep.mubr.bf16.mxu0 0
    %114 = vmatmul.mubr.bf16.gmra.mxu0 %v16
    %v115 = vpop.f32.mrf.mxu0
    %v116 = vadd.f32 0.0, %v115
    %v117 = vpop.f32.mrf.mxu0
    %v118 = vpop.f32.mrf.mxu0
    %v119 = vpop.f32.mrf.mxu0
    %120 = vdwg.mxu0
    %v121 = vld [vmem:[%s2] sm:$0x1]
    %v123 = vlaneseq
    %v124 = vshrl.u32 %v123, 7
    %v125 = vsub.s32 0, %v124
    %v126 = vrot.slane %v121, %v125
    %v128 = vmul.f32 %v116, %v126
    %129 = vst [vmem:[#allocation2] sm:$0xff] %v128
    // Predicated region
    $region14: #{arcface_forward.1} parent=1 // pred_check
      _
    $region15: #{arcface_forward.1} parent=1 // pred_check_branch
      %131 = sbr.rel (0) target = $region17
    $region16: #{arcface_forward.1} parent=1 // pred_region
      %s133 = ssub.s32 128, 128
      %134 = vsyncadd [#allocation3], %s133
      %s136 = sshll.u32 [#allocation2], 4
      %s137 = int_to_ptr.vmem [resolvable:$true] %s136
      %139 = dma.vmem_to_hbm [thread:$0]  %s137, 128, %s3, [#allocation3]
    $region17: #{arcface_forward.1} parent=1 // pred_fallthru
      _
    // Predicated region
    $region18: #{arcface_forward.1} parent=1 // pred_check
      _
    $region19: #{arcface_forward.1} parent=1 // pred_check_branch
      %141 = sbr.rel (0) target = $region21
    $region20: #{arcface_forward.1} parent=1 // pred_region
      %142 = dma.done [#allocation3], 128
    $region21: #{arcface_forward.1} parent=1 // pred_fallthru
      _
    %143 = vsyncpa [#allocation3], 1

</llo_original>
